<compile_context>
chip_gen: v7x
topology: tpu7x:2x2x1
jax: 0.10.0
libtpu: 0.0.40
codegen_flags: <defaults>
</compile_context>

<pallas_src>
import functools

import jax
import jax.numpy as jnp
from jax import lax
from jax.experimental import pallas as pl
from jax.experimental.pallas import tpu as pltpu


# --------------------------------------------------------------------------- #
# Kernels
# --------------------------------------------------------------------------- #
def _lp_norm_kernel(x_ref, o_ref, *, p, eps):
    """Single-pass kernel. Block: (TB, R, TW); full R => reduction is local."""
    xf = x_ref[...].astype(jnp.float32)
    if p == 2.0:
        sumsq = jnp.sum(xf * xf, axis=1, keepdims=True)
        # x / clamp_min(||x||_2, eps) == x * rsqrt(max(sumsq, eps^2))
        inv = lax.rsqrt(jnp.maximum(sumsq, eps * eps))
    elif p == 1.0:
        norm = jnp.sum(jnp.abs(xf), axis=1, keepdims=True)
        inv = pl.reciprocal(jnp.maximum(norm, eps), approx=False)
    else:
        norm = jnp.sum(jnp.abs(xf) ** p, axis=1, keepdims=True) ** (1.0 / p)
        inv = pl.reciprocal(jnp.maximum(norm, eps), approx=False)
    # Re-read from VMEM so the f32 block copy need not stay live across the
    # reduction (VMEM reloads are nearly free; keeps vreg pressure low).
    o_ref[...] = (x_ref[...].astype(jnp.float32) * inv).astype(o_ref.dtype)


def _partial_pow_sum_kernel(x_ref, s_ref, *, p):
    """Two-pass fallback, pass 1: accumulate sum(|x|^p) over the R grid axis."""
    @pl.when(pl.program_id(2) == 0)
    def _():
        s_ref[...] = jnp.zeros_like(s_ref)

    xf = x_ref[...].astype(jnp.float32)
    if p == 2.0:
        s_ref[...] += jnp.sum(xf * xf, axis=1, keepdims=True)
    elif p == 1.0:
        s_ref[...] += jnp.sum(jnp.abs(xf), axis=1, keepdims=True)
    else:
        s_ref[...] += jnp.sum(jnp.abs(xf) ** p, axis=1, keepdims=True)


def _apply_norm_kernel(x_ref, s_ref, o_ref, *, p, eps):
    """Two-pass fallback, pass 2: normalize using the precomputed power sums."""
    s = s_ref[...]
    if p == 2.0:
        inv = lax.rsqrt(jnp.maximum(s, eps * eps))
    else:
        inv = pl.reciprocal(jnp.maximum(s ** (1.0 / p), eps), approx=False)
    o_ref[...] = (x_ref[...].astype(jnp.float32) * inv).astype(o_ref.dtype)


# --------------------------------------------------------------------------- #
# Tiling / VMEM accounting helpers
# --------------------------------------------------------------------------- #
def _padded_block_bytes(tb, r, tw, itemsize):
    """Bytes of a (tb, r, tw) VMEM block including (sublane, 128) tile padding."""
    sub = max(8, 32 // itemsize)          # 8 f32, 16 bf16, 32 int8 sublanes
    r_pad = ((r + sub - 1) // sub) * sub
    w_pad = ((tw + 127) // 128) * 128
    return tb * r_pad * w_pad * itemsize


def _lane_tile_candidates(W, itemsize):
    """Full W plus lane-aligned divisors whose contiguous DMA run >= 512 B."""
    min_run = max(128, ((512 // itemsize + 127) // 128) * 128)
    cands = [W]
    if W % 128 == 0:
        d = min_run
        while d < W:
            if W % d == 0:
                cands.append(d)
            d += 128
    return cands


def _chip_params(itemsize):
    """(target_block_bytes, default_scoped_vmem, vmem_capacity, min_grid_steps)."""
    kind = ""
    try:
        kind = jax.devices()[0].device_kind.lower()
    except Exception:
        pass
    if "v7" in kind:
        target = (7 << 20) if itemsize >= 4 else (4 << 20)
        params = (target, 32 << 20, 64 << 20, 4)       # 2 TCs -> want >=4 even steps
    elif "v6" in kind:
        params = (4 << 20, 32 << 20, 128 << 20, 3)
    elif "v5" in kind:
        params = (2 << 20, 16 << 20, 128 << 20, 3)     # stay under default scoped
    else:
        params = (2 << 20, 16 << 20, 64 << 20, 3)      # unknown: conservative
    target, default_scoped, vmem_cap, min_steps = params
    try:
        vmem_cap = int(pltpu.get_tpu_info().vmem_capacity_bytes)
    except Exception:
        pass
    return target, default_scoped, vmem_cap, min_steps


def _choose_tiles(B, R, W, itemsize, target_bytes, min_steps):
    """Pick (tb, tw): fit the padded block in budget, then maximize grid steps
    (capped at min_steps, prefer even on megacore), then the largest block."""
    tw_cands = _lane_tile_candidates(W, itemsize)
    tb_cands = [d for d in range(1, B + 1) if B % d == 0]

    best, best_key = (1, W), None
    for tw in tw_cands:
        for tb in tb_cands:
            cost = _padded_block_bytes(tb, R, tw, itemsize)
            steps = (B // tb) * (W // tw)
            fits = cost <= target_bytes
            even_ok = (steps % 2 == 0) if min_steps >= 4 else True
            key = (fits, min(steps, min_steps), even_ok,
                   cost if fits else -cost)
            if best_key is None or key > best_key:
                best_key, best = key, (tb, tw)
    return best


def _choose_fallback_tiles(B, R, W, itemsize, target_bytes):
    """Pick (tr, tw) chunks for the two-pass path (tb is fixed to 1)."""
    sub = max(8, 32 // itemsize)
    tw_cands = _lane_tile_candidates(W, itemsize)
    tr_cands = [R]
    d = sub
    while d < R:
        if R % d == 0:
            tr_cands.append(d)
        d += sub
    # TODO(synk): if R has no multiple-of-sublane divisor the chunk stays tr=R,
    # which can still exceed VMEM for pathological (prime, huge) R.

    best, best_key = (R, W), None
    for tw in tw_cands:
        for tr in tr_cands:
            cost = _padded_block_bytes(1, tr, tw, itemsize)
            fits = cost <= target_bytes
            key = (fits, cost if fits else -cost)
            if best_key is None or key > best_key:
                best_key, best = key, (tr, tw)
    return best


# --------------------------------------------------------------------------- #
# Wrappers
# --------------------------------------------------------------------------- #
def _single_pass(x3, p, eps, itemsize, target, default_scoped, safe_cap, min_steps):
    B, R, W = x3.shape
    tb, tw = _choose_tiles(B, R, W, itemsize, target, min_steps)
    block = (tb, R, tw)
    grid = (B // tb, W // tw)

    needed = (4 * _padded_block_bytes(tb, R, tw, itemsize)      # in+out, dbl-buffered
              + 2 * _padded_block_bytes(tb, R, tw, 4)           # f32 temporaries
              + (1 << 20))
    vmem_limit = int(min(needed, safe_cap)) if needed > default_scoped else None

    return pl.pallas_call(
        functools.partial(_lp_norm_kernel, p=p, eps=eps),
        out_shape=jax.ShapeDtypeStruct(x3.shape, x3.dtype),
        grid=grid,
        in_specs=[pl.BlockSpec(block, lambda b, w: (b, 0, w))],
        out_specs=pl.BlockSpec(block, lambda b, w: (b, 0, w)),
        compiler_params=pltpu.CompilerParams(
            dimension_semantics=("parallel", "parallel"),
            vmem_limit_bytes=vmem_limit),
    )(x3)


def _two_pass(x3, p, eps, itemsize, target, default_scoped, safe_cap):
    B, R, W = x3.shape
    tr, tw = _choose_fallback_tiles(B, R, W, itemsize, target)
    n_w, n_r = W // tw, R // tr

    needed = (4 * _padded_block_bytes(1, tr, tw, itemsize)
              + 2 * _padded_block_bytes(1, tr, tw, 4)
              + 4 * _padded_block_bytes(1, 1, tw, 4)
              + (1 << 20))
    vmem_limit = int(min(needed, safe_cap)) if needed > default_scoped else None

    # Pass 1: f32 sum(|x|^p) over R, accumulated across the last ("arbitrary") axis.
    pow_sum = pl.pallas_call(
        functools.partial(_partial_pow_sum_kernel, p=p),
        out_shape=jax.ShapeDtypeStruct((B, 1, W), jnp.float32),
        grid=(B, n_w, n_r),
        in_specs=[pl.BlockSpec((1, tr, tw), lambda b, w, r: (b, r, w))],
        out_specs=pl.BlockSpec((1, 1, tw), lambda b, w, r: (b, 0, w)),
        compiler_params=pltpu.CompilerParams(
            dimension_semantics=("parallel", "parallel", "arbitrary"),
            vmem_limit_bytes=vmem_limit),
    )(x3)

    # Pass 2: normalize, streaming x a second time.
    return pl.pallas_call(
        functools.partial(_apply_norm_kernel, p=p, eps=eps),
        out_shape=jax.ShapeDtypeStruct(x3.shape, x3.dtype),
        grid=(B, n_w, n_r),
        in_specs=[pl.BlockSpec((1, tr, tw), lambda b, w, r: (b, r, w)),
                  pl.BlockSpec((1, 1, tw), lambda b, w, r: (b, 0, w))],
        out_specs=pl.BlockSpec((1, tr, tw), lambda b, w, r: (b, r, w)),
        compiler_params=pltpu.CompilerParams(
            dimension_semantics=("parallel", "parallel", "parallel"),
            vmem_limit_bytes=vmem_limit),
    )(x3, pow_sum)


def lp_norm(x, p=2.0, eps=1e-10, *, force_two_pass=False, target_bytes=None):
    """Pallas equivalent of lp_norm_layer(p, dim=(1,2), eps).forward(x)."""
    if x.ndim < 3:
        raise ValueError("lp_norm expects an input with at least 3 dims (dim=(1,2)).")
    B = x.shape[0]
    R = x.shape[1] * x.shape[2]                 # joint (C, H) reduction axis
    W = 1
    for d in x.shape[3:]:
        W *= d                                  # kept trailing dims, lane axis
    orig_shape = x.shape
    x3 = x.reshape(B, R, W)                     # free: contiguous NCHW collapse

    itemsize = jnp.dtype(x.dtype).itemsize
    target, default_scoped, vmem_cap, min_steps = _chip_params(itemsize)
    if target_bytes is not None:
        target = target_bytes
    safe_cap = max(default_scoped, vmem_cap - (16 << 20))

    # Can the full-R reduction fit in a single-pass block at the minimum tile?
    tw_min = min(_lane_tile_candidates(W, itemsize))
    needed_min = (4 * _padded_block_bytes(1, R, tw_min, itemsize)
                  + 2 * _padded_block_bytes(1, R, tw_min, 4)
                  + (1 << 20))
    two_pass = force_two_pass or (needed_min > safe_cap)

    if two_pass:
        out3 = _two_pass(x3, p, eps, itemsize, target, default_scoped, safe_cap)
    else:
        out3 = _single_pass(x3, p, eps, itemsize, target, default_scoped,
                            safe_cap, min_steps)
    return out3.reshape(orig_shape)


def lp_norm_ref(x, p=2.0, eps=1e-10):
    """Pure-JAX reference mirroring torch.nn.functional.normalize semantics."""
    norm = jnp.sum(jnp.abs(x.astype(jnp.float32)) ** p,
                   axis=(1, 2), keepdims=True) ** (1.0 / p)
    return (x / jnp.maximum(norm, eps)).astype(x.dtype)


if __name__ == "__main__":
    key = jax.random.PRNGKey(0)
    x = jax.random.normal(key, (2, 4, 16, 16), dtype=jnp.float32)
    ref = lp_norm_ref(x, p=2.0, eps=1e-10)

    # Main (single-pass) path.
    out = jax.block_until_ready(lp_norm(x, p=2.0, eps=1e-10))
    assert out.shape == x.shape and out.dtype == x.dtype
    assert jnp.allclose(out, ref, atol=1e-5, rtol=1e-5), "single-pass mismatch"

    # Exercise the two-pass fallback (forced, tiny tiles => 4 reduction chunks).
    out2 = jax.block_until_ready(
        lp_norm(x, p=2.0, eps=1e-10, force_two_pass=True, target_bytes=8 * 1024))
    assert jnp.allclose(out2, ref, atol=1e-5, rtol=1e-5), "two-pass mismatch"

    print("KERNEL_OK")
</pallas_src>

<mosaic_0001>
module attributes {stable_mosaic.version = 11 : i64} {
  func.func @_lp_norm_kernel(%arg0: i32, %arg1: i32, %arg2: memref<1x64x16xf32, #tpu.memory_space<vmem>>, %arg3: memref<1x64x16xf32, #tpu.memory_space<vmem>>) attributes {dimension_semantics = [#tpu.dimension_semantics<parallel>, #tpu.dimension_semantics<parallel>], iteration_bounds = array<i64: 2, 1>, scalar_prefetch = 0 : i64, scratch_operands = 0 : i64, tpu.core_type = #tpu.core_type<tc>, window_params = [{transform_indices = @transform_0, window_bounds = array<i64: 1, 64, 16>}, {transform_indices = @transform_1, window_bounds = array<i64: 1, 64, 16>}]} {
    %c0 = arith.constant 0 : index
    %c0_0 = arith.constant 0 : index
    %c0_1 = arith.constant 0 : index
    %0 = vector.load %arg2[%c0, %c0_0, %c0_1] : memref<1x64x16xf32, #tpu.memory_space<vmem>>, vector<1x64x16xf32>
    %1 = arith.mulf %0, %0 : vector<1x64x16xf32>
    %cst = arith.constant dense<0.000000e+00> : vector<1x16xf32>
    %2 = vector.multi_reduction <add>, %1, %cst [1] : vector<1x64x16xf32> to vector<1x16xf32>
    %3 = vector.shape_cast %2 : vector<1x16xf32> to vector<1x1x16xf32>
    %cst_2 = arith.constant 9.99999968E-21 : f32
    %4 = vector.broadcast %cst_2 : f32 to vector<1x1x16xf32>
    %5 = arith.maximumf %3, %4 : vector<1x1x16xf32>
    %6 = math.rsqrt %5 : vector<1x1x16xf32>
    %c0_3 = arith.constant 0 : index
    %c0_4 = arith.constant 0 : index
    %c0_5 = arith.constant 0 : index
    %7 = vector.load %arg2[%c0_3, %c0_4, %c0_5] : memref<1x64x16xf32, #tpu.memory_space<vmem>>, vector<1x64x16xf32>
    %8 = vector.broadcast %6 : vector<1x1x16xf32> to vector<1x64x16xf32>
    %9 = arith.mulf %7, %8 : vector<1x64x16xf32>
    %c0_6 = arith.constant 0 : index
    %c0_7 = arith.constant 0 : index
    %c0_8 = arith.constant 0 : index
    %10 = vector.load %arg3[%c0_6, %c0_7, %c0_8] : memref<1x64x16xf32, #tpu.memory_space<vmem>>, vector<1x64x16xf32>
    tpu.vector_store %arg3[%c0_6, %c0_7, %c0_8], %9 {strides = array<i32>} : memref<1x64x16xf32, #tpu.memory_space<vmem>>, vector<1x64x16xf32>,
    return
  }
  func.func @transform_0(%arg0: i32, %arg1: i32) -> (i32, i32, i32) {
    %c0_i32 = arith.constant 0 : i32
    %c0_i32_0 = arith.constant 0 : i32
    return %arg0, %c0_i32, %arg1 : i32, i32, i32
  }
  func.func @transform_1(%arg0: i32, %arg1: i32) -> (i32, i32, i32) {
    %c0_i32 = arith.constant 0 : i32
    %c0_i32_0 = arith.constant 0 : i32
    return %arg0, %c0_i32, %arg1 : i32, i32, i32
  }
}

</mosaic_0001>

<llo_original>
// kernel: tpu_custom_call.1
$region0: #{tpu_custom_call.1}
  #allocation0 [shape = 'u32[]', space=smem, size = 0x4, offset = 0x4, fixed_abs, tag = 'smem constant byte address 0x4 - core index']
  #allocation1 [shape = 'u32[144,128]{1,0:T(1,128)}', space=vmem, size = 0x12000, scoped, tag = 'internal scratch']
  %s0 = inlined_call_operand.vmem [shape: f32[2,64,16], index: 0, kind: input, shape index: {}]
  %s1 = inlined_call_operand.vmem [shape: f32[2,64,16], index: 1, kind: output, shape index: {}]
  %s2 = sld [smem:[#allocation0]]
  $region37: #{tpu_custom_call.1} parent=0
    _
  %s4 = ssub.s32 1, %s2
  %s5 = scalar_select 0, %s4, %s2
  loop: start=0, step=1, limit=4
  $region2: #{tpu_custom_call.1} parent=0 // loop_pre_header
    _
  $region3: #{tpu_custom_call.1} parent=0 // loop_header
    %s7 = sphi 0, %s11
    %p8 = scmp.ge.s32.totalorder %s7, 4
    %s14 = sphi 0, %s26
    %s15 = sphi 0, %s22
    %s16 = sphi 0, %s14
    %s17 = sphi 0, %s15
    %s18 = sphi 0, %s16
    %s19 = sphi 0, %s17
    %s31 = sphi 0, %s33
    %s34 = sphi 0, %s31
    %s35 = sphi 0, %s34
    %s51 = sphi 0, %s35
    %s59 = sphi 0, %s61
    %s62 = sphi 0, %s59
    %s63 = sphi 0, %s62
    %s79 = sphi 0, %s63
  $region4: #{tpu_custom_call.1} parent=0 // loop_header_branch
    %10 = sbr.rel (%p8) target = $region8
  $region5: #{tpu_custom_call.1} parent=0 // loop_body
    %s12 = ssub.s32 %s7, 1
    %s13 = ssub.s32 %s7, 2
    %s20 = sadd.s32 1, %s15
    %p21 = scmp.ge.s32.totalorder %s20, 1
    %s22 = scalar_select %p21, 0, %s20
    %s23 = sadd.s32 1, %s14
    %s24 = scalar_select %p21, %s23, %s14
    %p25 = scmp.ge.s32.totalorder %s24, 2
    %s26 = scalar_select %p25, 0, %s24
    %s27 = ssub.s32 %s14, %s26
    %s28 = ssub.s32 %s15, %s22
    %s29 = sor.u32 %s27, %s28
    %p30 = scmp.eq.s32.totalorder %s29, 0
    %s32 = sadd.s32 %s31, 1
    %s33 = scalar_select %p30, %s31, %s32
    %p36 = pneg %p30
    %p37 = scmp.eq.s32.totalorder %s7, 1
    %p38 = por %p36, %p37
    %p39 = scmp.ne.s32.totalorder %s31, %s34
    %p40 = scmp.eq.s32.totalorder %s7, 0
    %p41 = por %p39, %p40
    %p42 = scmp.ne.s32.totalorder %s31, %s34
    %p43 = scmp.eq.s32.totalorder %s12, 1
    %p44 = por %p42, %p43
    %p45 = scmp.ne.s32.totalorder %s34, %s35
    %p46 = scmp.eq.s32.totalorder %s12, 0
    %p47 = por %p45, %p46
    %p48 = scmp.ne.s32.totalorder %s34, %s35
    %p49 = scmp.eq.s32.totalorder %s13, 1
    %p50 = por %p48, %p49
    %p52 = scmp.ne.s32.totalorder %s35, %s51
    %p53 = scmp.eq.s32.totalorder %s13, 0
    %p54 = por %p52, %p53
    %s55 = ssub.s32 %s14, %s26
    %s56 = ssub.s32 %s15, %s22
    %s57 = sor.u32 %s55, %s56
    %p58 = scmp.eq.s32.totalorder %s57, 0
    %s60 = sadd.s32 %s59, 1
    %s61 = scalar_select %p58, %s59, %s60
    %p64 = pneg %p58
    %p65 = scmp.eq.s32.totalorder %s7, 1
    %p66 = por %p64, %p65
    %p67 = scmp.ne.s32.totalorder %s59, %s62
    %p68 = scmp.eq.s32.totalorder %s7, 0
    %p69 = por %p67, %p68
    %p70 = scmp.ne.s32.totalorder %s59, %s62
    %p71 = scmp.eq.s32.totalorder %s12, 1
    %p72 = por %p70, %p71
    %p73 = scmp.ne.s32.totalorder %s62, %s63
    %p74 = scmp.eq.s32.totalorder %s12, 0
    %p75 = por %p73, %p74
    %p76 = scmp.ne.s32.totalorder %s62, %s63
    %p77 = scmp.eq.s32.totalorder %s13, 1
    %p78 = por %p76, %p77
    %p80 = scmp.ne.s32.totalorder %s63, %s79
    %p81 = scmp.eq.s32.totalorder %s13, 0
    %p82 = por %p80, %p81
    %p83 = scmp.le.s32.totalorder 1, %s7
    %p84 = scmp.lt.s32.totalorder %s7, 3
    %p85 = pnand %p83, %p84
    %p86 = pneg %p85
    // Predicated region
    $region9: #{tpu_custom_call.1} parent=5 // pred_check
      _
    $region10: #{tpu_custom_call.1} parent=5 // pred_check_branch
      %88 = sbr.rel (%p85) target = $region12
    $region11: #{tpu_custom_call.1} parent=5 // pred_region
      %s89 = ssub.s32 %s7, 1
    $region12: #{tpu_custom_call.1} parent=5 // pred_fallthru
      _
    %p90 = scmp.lt.s32.totalorder %s7, 2
    // Predicated region
    $region13: #{tpu_custom_call.1} parent=5 // pred_check
      %p91 = pneg %p90
    $region14: #{tpu_custom_call.1} parent=5 // pred_check_branch
      %93 = sbr.rel (%p91) target = $region16
    $region15: #{tpu_custom_call.1} parent=5 // pred_region
      // Predicated region
      $region17: #{tpu_custom_call.1} parent=15 // pred_check
        %p94 = pneg %p41
      $region18: #{tpu_custom_call.1} parent=15 // pred_check_branch
        %96 = sbr.rel (%p94) target = $region20
      $region19: #{tpu_custom_call.1} parent=15 // pred_region
        %p97 = scmp.lt.s32.totalorder %s14, 1
        %s98 = scalar_select %p97, %s14, 1
        %p99 = scmp.lt.s32.totalorder %s15, 0
        %s100 = scalar_select %p99, %s15, 0
        %s101 = smul.addr %s98, 8
        %s102 = sadd.s32 %s100, %s101
        %s103 = smul.addr %s102, 8
        %s104 = scalar_lea.vmem %s0, %s103
      $region20: #{tpu_custom_call.1} parent=15 // pred_fallthru
        _
    $region16: #{tpu_custom_call.1} parent=5 // pred_fallthru
      _
    %p105 = scmp.le.s32.totalorder 1, %s7
    %p106 = scmp.lt.s32.totalorder %s7, 3
    %p107 = pnand %p105, %p106
    %p108 = pneg %p107
    // Predicated region
    $region21: #{tpu_custom_call.1} parent=5 // pred_check
      _
    $region22: #{tpu_custom_call.1} parent=5 // pred_check_branch
      %110 = sbr.rel (%p107) target = $region24
    $region23: #{tpu_custom_call.1} parent=5 // pred_region
      %s111 = ssub.s32 %s7, 1
      %p112 = scmp.lt.s32.totalorder %s16, 1
      %s113 = scalar_select %p112, %s16, 1
      %p114 = scmp.lt.s32.totalorder %s17, 0
      %s115 = scalar_select %p114, %s17, 0
      %s116 = smul.addr %s113, 8
      %s117 = sadd.s32 %s115, %s116
      %s118 = smul.addr %s117, 8
      %s119 = scalar_lea.vmem %s0, %s118
      %p120 = pneg %p47
      %p121 = pneg %p44
      %p122 = pneg %p75
      %p123 = pneg %p72
      %p124 = scmp.lt.s32.totalorder %s16, 1
      %s125 = scalar_select %p124, %s16, 1
      %p126 = scmp.lt.s32.totalorder %s17, 0
      %s127 = scalar_select %p126, %s17, 0
      %s128 = smul.addr %s125, 8
      %s129 = sadd.s32 %s127, %s128
      %s130 = smul.addr %s129, 8
      %s131 = scalar_lea.vmem %s1, %s130
      %p132 = scmp.lt.s32.totalorder %s16, 1
      %s133 = scalar_select %p132, %s16, 1
      %p134 = scmp.lt.s32.totalorder %s17, 0
      %s135 = scalar_select %p134, %s17, 0
      %s136 = smul.addr %s133, 8
      %s137 = sadd.s32 %s135, %s136
      %s138 = smul.addr %s137, 8
      %s139 = scalar_lea.vmem %s0, %s138
      %p140 = scmp.lt.s32.totalorder %s16, 1
      %s141 = scalar_select %p140, %s16, 1
      %p142 = scmp.lt.s32.totalorder %s17, 0
      %s143 = scalar_select %p142, %s17, 0
      %s144 = smul.addr %s141, 8
      %s145 = sadd.s32 %s143, %s144
      %s146 = smul.addr %s145, 8
      %s147 = scalar_lea.vmem %s1, %s146
      %v148 = vld [vmem:[%s139] sm:$0xff]
      %v149 = vld [vmem:[%s139 + $0x8] sm:$0xff]
      %v150 = vld [vmem:[%s139 + $0x10] sm:$0xff]
      %v151 = vld [vmem:[%s139 + $0x18] sm:$0xff]
      %v152 = vld [vmem:[%s139 + $0x20] sm:$0xff]
      %v153 = vld [vmem:[%s139 + $0x28] sm:$0xff]
      %v154 = vld [vmem:[%s139 + $0x30] sm:$0xff]
      %v155 = vld [vmem:[%s139 + $0x38] sm:$0xff]
      %v156 = vmul.f32 %v148, %v148
      %v157 = vmul.f32 %v149, %v149
      %v158 = vmul.f32 %v150, %v150
      %v159 = vmul.f32 %v151, %v151
      %v160 = vmul.f32 %v152, %v152
      %v161 = vmul.f32 %v153, %v153
      %v162 = vmul.f32 %v154, %v154
      %v163 = vmul.f32 %v155, %v155
      %vm164 = vcmask 130048
      %v165 = vsel %vm164, %v156, 0.0
      %v166 = vsel %vm164, %v157, 0.0
      %v167 = vadd.f32 %v165, %v166
      %v168 = vsel %vm164, %v158, 0.0
      %v169 = vadd.f32 %v167, %v168
      %v170 = vsel %vm164, %v159, 0.0
      %v171 = vadd.f32 %v169, %v170
      %v172 = vsel %vm164, %v160, 0.0
      %v173 = vadd.f32 %v171, %v172
      %v174 = vsel %vm164, %v161, 0.0
      %v175 = vadd.f32 %v173, %v174
      %v176 = vsel %vm164, %v162, 0.0
      %v177 = vadd.f32 %v175, %v176
      %v178 = vsel %vm164, %v163, 0.0
      %v179 = vadd.f32 %v177, %v178
      %v180 = vrot.slane %v179, 4
      %v181 = vadd.f32 %v179, %v180
      %v182 = vrot.slane %v181, 2
      %v183 = vadd.f32 %v181, %v182
      %v184 = vrot.slane %v183, 1
      %v185 = vadd.f32 %v183, %v184
      %v186 = vmax.f32 %v185, 1e-20
      %v187 = vrsqrt.pop %v186
      %v188 = vmul.f32 %v148, %v187
      %v189 = vmul.f32 %v149, %v187
      %v190 = vmul.f32 %v150, %v187
      %v191 = vmul.f32 %v151, %v187
      %v192 = vmul.f32 %v152, %v187
      %v193 = vmul.f32 %v153, %v187
      %v194 = vmul.f32 %v154, %v187
      %v195 = vmul.f32 %v155, %v187
      %196 = vst.msk [vmem:[%s147] sm:$0xff] %vm164, %v188
      %197 = vst.msk [vmem:[%s147 + $0x8] sm:$0xff] %vm164, %v189
      %198 = vst.msk [vmem:[%s147 + $0x10] sm:$0xff] %vm164, %v190
      %199 = vst.msk [vmem:[%s147 + $0x18] sm:$0xff] %vm164, %v191
      %200 = vst.msk [vmem:[%s147 + $0x20] sm:$0xff] %vm164, %v192
      %201 = vst.msk [vmem:[%s147 + $0x28] sm:$0xff] %vm164, %v193
      %202 = vst.msk [vmem:[%s147 + $0x30] sm:$0xff] %vm164, %v194
      %203 = vst.msk [vmem:[%s147 + $0x38] sm:$0xff] %vm164, %v195
      %p204 = scmp.lt.s32.totalorder %s16, 1
      %s205 = scalar_select %p204, %s16, 1
      %p206 = scmp.lt.s32.totalorder %s17, 0
      %s207 = scalar_select %p206, %s17, 0
      %s208 = smul.addr %s205, 8
      %s209 = sadd.s32 %s207, %s208
      %s210 = smul.addr %s209, 8
      %s211 = scalar_lea.vmem %s1, %s210
      // Predicated region
      $region25: #{tpu_custom_call.1} parent=23 // pred_check
        %p212 = pneg %p72
      $region26: #{tpu_custom_call.1} parent=23 // pred_check_branch
        %214 = sbr.rel (%p212) target = $region28
      $region27: #{tpu_custom_call.1} parent=23 // pred_region
        _
      $region28: #{tpu_custom_call.1} parent=23 // pred_fallthru
        _
    $region24: #{tpu_custom_call.1} parent=5 // pred_fallthru
      _
    %p215 = scmp.le.s32.totalorder 2, %s7
    // Predicated region
    $region29: #{tpu_custom_call.1} parent=5 // pred_check
      %p216 = pneg %p215
    $region30: #{tpu_custom_call.1} parent=5 // pred_check_branch
      %218 = sbr.rel (%p216) target = $region32
    $region31: #{tpu_custom_call.1} parent=5 // pred_region
      %s219 = ssub.s32 %s7, 2
      // Predicated region
      $region33: #{tpu_custom_call.1} parent=31 // pred_check
        %p220 = pneg %p78
      $region34: #{tpu_custom_call.1} parent=31 // pred_check_branch
        %222 = sbr.rel (%p220) target = $region36
      $region35: #{tpu_custom_call.1} parent=31 // pred_region
        %p223 = scmp.lt.s32.totalorder %s18, 1
        %s224 = scalar_select %p223, %s18, 1
        %p225 = scmp.lt.s32.totalorder %s19, 0
        %s226 = scalar_select %p225, %s19, 0
        %s227 = smul.addr %s224, 8
        %s228 = sadd.s32 %s226, %s227
        %s229 = smul.addr %s228, 8
        %s230 = scalar_lea.vmem %s1, %s229
      $region36: #{tpu_custom_call.1} parent=31 // pred_fallthru
        _
    $region32: #{tpu_custom_call.1} parent=5 // pred_fallthru
      _
  $region6: #{tpu_custom_call.1} parent=0 // loop_footer
    %s11 = sadd.s32 1, %s7
  $region7: #{tpu_custom_call.1} parent=0 // loop_footer_branch
    %6 = sbr.rel target = $region3
  $region8: #{tpu_custom_call.1} parent=0 // loop_exit
    _

</llo_original>
